<compile_context>
chip_gen: v5e
topology: v5e:2x2
jax: 0.10.0
libtpu: 0.0.40
codegen_flags: <defaults>
</compile_context>

<pallas_src>
import math

import jax
import jax.numpy as jnp
from jax.experimental import pallas as pl
from jax.experimental.pallas import tpu as pltpu

_SQRT_2_OVER_PI = math.sqrt(2.0 / math.pi)
_LANE_CANDIDATES = (4096, 2048, 1024, 512, 256, 128)
_MIN_PALLAS_ELEMS = 65536            # below this, fused XLA beats a pallas_call
_VMEM_LIMIT_BYTES = 48 * 1024 * 1024


def _gelu_kernel(x_ref, o_ref):
    x = x_ref[...].astype(jnp.float32)
    x2 = x * x  # inner = c * x * (1 + 0.044715 * x^2)  == c * (x + 0.044715 x^3)
    inner = jnp.float32(_SQRT_2_OVER_PI) * x * (
        jnp.float32(1.0) + jnp.float32(0.044715) * x2)
    y = jnp.float32(0.5) * x * (jnp.float32(1.0) + jnp.tanh(inner))
    o_ref[...] = y.astype(o_ref.dtype)


def _gelu_jnp(x):
    """XLA-fused fallback (identical math) for tiny inputs / ragged tails."""
    xf = x.astype(jnp.float32)
    c = jnp.float32(_SQRT_2_OVER_PI)
    y = 0.5 * xf * (1.0 + jnp.tanh(c * (xf + 0.044715 * (xf * xf * xf))))
    return y.astype(x.dtype)


def _gelu_2d(x2d):
    """Run the Pallas kernel on a (rows, cols) slab; cols is a multiple of 128."""
    rows, cols = x2d.shape
    dtype = x2d.dtype
    itemsize = dtype.itemsize

    # ~4 MiB per I/O buffer: 1M elems for 4-byte dtypes, 2M for <=2-byte dtypes.
    # Double-buffered in+out plus f32 intermediates stays well under the 48 MiB
    # scoped-VMEM limit (and under v7x's 64 MiB physical VMEM).
    target_elems = (2 * 1024 * 1024) if itemsize <= 2 else (1024 * 1024)
    tr_target = max(16, (target_elems // cols) // 16 * 16)  # multiple of 16
    tr = rows if rows <= tr_target else tr_target            # full-dim or 16k

    grid = (pl.cdiv(rows, tr),)
    total = rows * cols
    cost = pl.CostEstimate(
        flops=9 * total,
        transcendentals=total,
        bytes_accessed=2 * total * itemsize,
    )
    return pl.pallas_call(
        _gelu_kernel,
        out_shape=jax.ShapeDtypeStruct((rows, cols), dtype),
        grid_spec=pltpu.PrefetchScalarGridSpec(
            num_scalar_prefetch=0,
            grid=grid,
            in_specs=[pl.BlockSpec((tr, cols), lambda i: (i, 0))],
            out_specs=pl.BlockSpec((tr, cols), lambda i: (i, 0)),
        ),
        compiler_params=pltpu.CompilerParams(
            # TODO(synk): confirm on v7x (via xprof) that this single axis is
            # sharded across both TensorCores; if one TC sits idle, switch to
            # pltpu.CORE_PARALLEL on this axis.
            dimension_semantics=("parallel",),
            vmem_limit_bytes=_VMEM_LIMIT_BYTES,
        ),
        cost_estimate=cost,
    )(x2d)


def gelu_pallas(x, *, min_pallas_elems=_MIN_PALLAS_ELEMS):
    """Tanh-approx GeLU, matching the PyTorch module's explicit tanh formula.

    (This is the GPT-2 tanh approximation as written in the module, not
    torch.nn.GELU()'s default exact-erf form.)
    """
    total = x.size
    if total == 0:
        return x
    if total < min_pallas_elems:
        # A single-step pallas_call (pipeline prologue + DMA setup) costs more
        # than the XLA-fused elementwise at these sizes.
        return _gelu_jnp(x)

    flat = x.reshape(-1)

    # Fast path: lane-dense 2D view with no copy (cols divides total exactly).
    cols = next((c for c in _LANE_CANDIDATES if total % c == 0), None)
    if cols is not None:
        out2d = _gelu_2d(flat.reshape(total // cols, cols))
        return out2d.reshape(x.shape)

    # Ragged size: kernel on the 128-aligned prefix, tiny tail (<128 elems) in
    # plain jnp.  Avoids the old full pad + slice HBM round trips.
    aligned = (total // 128) * 128
    if aligned == 0:
        return _gelu_jnp(x)
    cols = next(c for c in _LANE_CANDIDATES if aligned % c == 0)
    head = _gelu_2d(flat[:aligned].reshape(aligned // cols, cols)).reshape(-1)
    tail = _gelu_jnp(flat[aligned:])
    return jnp.concatenate([head, tail]).reshape(x.shape)


if __name__ == "__main__":
    key = jax.random.PRNGKey(0)
    k0, k1, k2 = jax.random.split(key, 3)

    # Primary small test, consistent with a GPT-2 MLP activation slice:
    # batch=2, seq=8, hidden=32, fp32.  (Goes through the tiny-input fast path.)
    x = jax.random.normal(k0, (2, 8, 32), dtype=jnp.float32)
    y = gelu_pallas(x)
    jax.block_until_ready(y)
    assert y.shape == x.shape and y.dtype == x.dtype
    assert jnp.allclose(y, _gelu_jnp(x), atol=1e-5, rtol=1e-5), "f32 mismatch"

    # Same small shape forced through the Pallas kernel itself.
    y_forced = gelu_pallas(x, min_pallas_elems=0)
    jax.block_until_ready(y_forced)
    assert jnp.allclose(y_forced, _gelu_jnp(x), atol=1e-5, rtol=1e-5), \
        "forced-pallas small-shape mismatch"

    # Larger shape exercising the tiled (grid > 1), lane-dense Pallas path.
    x_big = jax.random.normal(k1, (4, 256, 3072), dtype=jnp.float32)
    y_big = gelu_pallas(x_big)
    jax.block_until_ready(y_big)
    assert jnp.allclose(y_big, _gelu_jnp(x_big), atol=1e-5, rtol=1e-5), \
        "tiled-path mismatch vs reference"

    # Ragged (total not a multiple of 128) bf16 input, forced through the
    # prefix-kernel + jnp-tail path.
    x_odd = jax.random.normal(k2, (3, 7, 96), dtype=jnp.bfloat16)
    y_odd = gelu_pallas(x_odd, min_pallas_elems=0)
    jax.block_until_ready(y_odd)
    assert y_odd.dtype == jnp.bfloat16
    assert jnp.allclose(y_odd.astype(jnp.float32),
                        _gelu_jnp(x_odd).astype(jnp.float32),
                        atol=2e-2, rtol=2e-2), "bf16/ragged mismatch"

    print("KERNEL_OK")
</pallas_src>

<mosaic_0001>
module attributes {stable_mosaic.version = 11 : i64} {
  func.func @_gelu_kernel(%arg0: i32, %arg1: memref<1x512xf32, #tpu.memory_space<vmem>>, %arg2: memref<1x512xf32, #tpu.memory_space<vmem>>) attributes {dimension_semantics = [#tpu.dimension_semantics<parallel>], iteration_bounds = array<i64: 1>, scalar_prefetch = 0 : i64, scratch_operands = 0 : i64, tpu.core_type = #tpu.core_type<tc>, window_params = [{transform_indices = @transform_0, window_bounds = array<i64: 1, 512>}, {transform_indices = @transform_1, window_bounds = array<i64: 1, 512>}]} {
    %c0 = arith.constant 0 : index
    %c0_0 = arith.constant 0 : index
    %0 = vector.load %arg1[%c0, %c0_0] : memref<1x512xf32, #tpu.memory_space<vmem>>, vector<1x512xf32>
    %1 = arith.mulf %0, %0 : vector<1x512xf32>
    %cst = arith.constant 0.797884583 : f32
    %2 = vector.broadcast %cst : f32 to vector<1x512xf32>
    %3 = arith.mulf %2, %0 : vector<1x512xf32>
    %cst_1 = arith.constant 4.471500e-02 : f32
    %4 = vector.broadcast %cst_1 : f32 to vector<1x512xf32>
    %5 = arith.mulf %4, %1 : vector<1x512xf32>
    %cst_2 = arith.constant 1.000000e+00 : f32
    %6 = vector.broadcast %cst_2 : f32 to vector<1x512xf32>
    %7 = arith.addf %6, %5 : vector<1x512xf32>
    %8 = arith.mulf %3, %7 : vector<1x512xf32>
    %cst_3 = arith.constant 5.000000e-01 : f32
    %9 = vector.broadcast %cst_3 : f32 to vector<1x512xf32>
    %10 = arith.mulf %9, %0 : vector<1x512xf32>
    %11 = math.tanh %8 : vector<1x512xf32>
    %cst_4 = arith.constant 1.000000e+00 : f32
    %12 = vector.broadcast %cst_4 : f32 to vector<1x512xf32>
    %13 = arith.addf %12, %11 : vector<1x512xf32>
    %14 = arith.mulf %10, %13 : vector<1x512xf32>
    %c0_5 = arith.constant 0 : index
    %c0_6 = arith.constant 0 : index
    %15 = vector.load %arg2[%c0_5, %c0_6] : memref<1x512xf32, #tpu.memory_space<vmem>>, vector<1x512xf32>
    tpu.vector_store %arg2[%c0_5, %c0_6], %14 {strides = array<i32>} : memref<1x512xf32, #tpu.memory_space<vmem>>, vector<1x512xf32>,
    return
  }
  func.func @transform_0(%arg0: i32) -> (i32, i32) {
    %c0_i32 = arith.constant 0 : i32
    %c0_i32_0 = arith.constant 0 : i32
    return %arg0, %c0_i32 : i32, i32
  }
  func.func @transform_1(%arg0: i32) -> (i32, i32) {
    %c0_i32 = arith.constant 0 : i32
    %c0_i32_0 = arith.constant 0 : i32
    return %arg0, %c0_i32 : i32, i32
  }
}

</mosaic_0001>

<llo_original>
// kernel: tpu_custom_call.1
$region0: #{tpu_custom_call.1}
  #allocation0 [shape = 'u32[]', space=smem, size = 0x4, offset = 0x4, fixed_abs, tag = 'smem constant byte address 0x4 - core index']
  #allocation1 [shape = 'u32[72,128]{1,0:T(1,128)}', space=vmem, size = 0x9000, scoped, tag = 'internal scratch']
  %s0 = inlined_call_operand.hbm [shape: f32[1,512], index: 0, kind: input, shape index: {}]
  %s1 = inlined_call_operand.hbm [shape: f32[1,512], index: 1, kind: output, shape index: {}]
  %s2 = sld [smem:[#allocation0]]
  $region18: #{tpu_custom_call.1} parent=0
    _
  %s4 = ssub.s32 1, %s2
  %s5 = scalar_select 0, %s4, %s2
  $region1: #{tpu_custom_call.1} parent=0
    #allocation2 [shape = 'u8[2048]{0}', space=vmem, size = 0x800, scoped, tag = 'input window, operand 0, single buffered']
    #allocation3 [shape = 's32[1]{0}', space=sflag, size = 0x4, scoped, tag = 'scoped memory for tpu_custom_call.1']
    #allocation4 [shape = 's32[1]{0}', space=sflag, size = 0x4, scoped, tag = 'scoped memory for tpu_custom_call.1']
    #allocation5 [shape = 'u8[2048]{0}', space=vmem, size = 0x800, scoped, tag = 'output window, operand 0, single buffered']
    %6 = vsyncpa [#allocation3], 0
    %7 = vsyncpa [#allocation4], 0
    // Predicated region
    $region2: #{tpu_custom_call.1} parent=1 // pred_check
      _
    $region3: #{tpu_custom_call.1} parent=1 // pred_check_branch
      %9 = sbr.rel (0) target = $region5
    $region4: #{tpu_custom_call.1} parent=1 // pred_region
      %11 = vsyncadd [#allocation3], 0
      %s13 = sshll.u32 %s0, 4
      %s14 = int_to_ptr.hbm [resolvable:$true] %s13
      %s15 = sshll.u32 [#allocation2], 4
      %s16 = int_to_ptr.vmem [resolvable:$true] %s15
      %18 = dma.hbm_to_vmem [thread:$0]  %s14, 64, %s16, [#allocation3]
    $region5: #{tpu_custom_call.1} parent=1 // pred_fallthru
      _
    // Predicated region
    $region6: #{tpu_custom_call.1} parent=1 // pred_check
      _
    $region7: #{tpu_custom_call.1} parent=1 // pred_check_branch
      %20 = sbr.rel (0) target = $region9
    $region8: #{tpu_custom_call.1} parent=1 // pred_region
      %22 = dma.done [#allocation3], 64
    $region9: #{tpu_custom_call.1} parent=1 // pred_fallthru
      _
    %v23 = vld [vmem:[#allocation2] sm:$0xf]
    %v24 = vmul.f32 %v23, %v23
    %v25 = vmul.f32 %v23, 0.7978846
    %v26 = vmul.f32 %v24, 0.044715
    %v27 = vadd.f32 %v26, 1.0
    %v28 = vmul.f32 %v25, %v27
    %v29 = vmul.f32 %v23, 0.5
    %v30 = vtanh.pop %v28
    %v31 = vadd.f32 %v30, 1.0
    %v32 = vmul.f32 %v29, %v31
    %v33 = vlaneseq
    %vm34 = vcmp.ge.s32.totalorder %v33, 0
    %vm35 = vcmp.lt.s32.totalorder %v33, 512
    %vm36 = vmand %vm34, %vm35
    %37 = vst.msk [vmem:[#allocation5] sm:$0xf] %vm36, %v32
    // Predicated region
    $region10: #{tpu_custom_call.1} parent=1 // pred_check
      _
    $region11: #{tpu_custom_call.1} parent=1 // pred_check_branch
      %39 = sbr.rel (0) target = $region13
    $region12: #{tpu_custom_call.1} parent=1 // pred_region
      %41 = vsyncadd [#allocation4], 0
      %s43 = sshll.u32 [#allocation5], 4
      %s44 = int_to_ptr.vmem [resolvable:$true] %s43
      %s45 = sshll.u32 %s1, 4
      %s46 = int_to_ptr.hbm [resolvable:$true] %s45
      %48 = dma.vmem_to_hbm [thread:$0]  %s44, 64, %s46, [#allocation4]
    $region13: #{tpu_custom_call.1} parent=1 // pred_fallthru
      _
    // Predicated region
    $region14: #{tpu_custom_call.1} parent=1 // pred_check
      _
    $region15: #{tpu_custom_call.1} parent=1 // pred_check_branch
      %50 = sbr.rel (0) target = $region17
    $region16: #{tpu_custom_call.1} parent=1 // pred_region
      %52 = dma.done [#allocation4], 64
    $region17: #{tpu_custom_call.1} parent=1 // pred_fallthru
      _
    %53 = vsyncpa [#allocation3], 1
    %54 = vsyncpa [#allocation4], 1

</llo_original>
